<compile_context>
chip_gen: v6e
topology: v6e:2x2x1
jax: 0.10.0
libtpu: 0.0.40
codegen_flags: <defaults>
</compile_context>

<pallas_src>
from functools import partial

import jax
import jax.numpy as jnp
from jax import lax
from jax.experimental import pallas as pl
from jax.experimental.pallas import tpu as pltpu


def _full_spec(shape):
    n = len(shape)
    return pl.BlockSpec(shape, lambda i: (0,) * n)


# ----------------------- direct conv (space-to-depth) -------------------------

def _conv_row_kernel(x_ref, w_ref, b_ref, o_ref, *, kd, ow):
    # One output spatial row per grid step: sum of Kd*Kd shifted matmuls over
    # the space-to-depth input.  x_ref / w_ref have constant index_maps, so
    # they are DMA'd into VMEM once and stay resident across the grid.
    r = pl.program_id(0)
    cout = o_ref.shape[-1]
    acc = jnp.zeros((ow, cout), jnp.float32)
    for di in range(kd):
        for dj in range(kd):
            patch = x_ref[r + di, dj:dj + ow, :]            # (ow, s*s*cin) bf16
            acc += jnp.dot(patch, w_ref[di * kd + dj],
                           preferred_element_type=jnp.float32)
    o_ref[...] = jnp.maximum(acc + b_ref[...], 0.0).astype(o_ref.dtype)


def conv2d_relu(x_hwc, w_oihw, b, *, stride, pad, out_dtype=jnp.bfloat16):
    """relu(conv2d(x, w) + b), stride `stride`, padding `pad`.

    The stride is folded into a space-to-depth reshape (one cheap XLA pass,
    same byte count as the input), so the kernel only needs contiguous shifted
    slices -- the im2col patch matrix is never materialized in HBM.
    TODO(synk): at real ResNet scale, additionally block Cout / the s*s*Cin
    contraction and batch several output rows per grid step.
    """
    h, w, cin = x_hwc.shape
    cout, cin2, kh, kw = w_oihw.shape
    assert cin == cin2 and kh == kw
    s = stride
    oh = (h + 2 * pad - kh) // s + 1
    ow = (w + 2 * pad - kw) // s + 1
    kd = -(-kh // s)                       # ceil(kh / stride)
    cs = s * s * cin

    # pad (rounding spatial dims up to a multiple of s) + space-to-depth, bf16.
    hp, wp = h + 2 * pad, w + 2 * pad
    hp_r, wp_r = -(-hp // s) * s, -(-wp // s) * s
    xp = jnp.pad(x_hwc.astype(jnp.bfloat16),
                 ((pad, pad + hp_r - hp), (pad, pad + wp_r - wp), (0, 0)))
    hs, ws = hp_r // s, wp_r // s
    x_s2d = (xp.reshape(hs, s, ws, s, cin)
               .transpose(0, 2, 1, 3, 4)
               .reshape(hs, ws, cs))

    # rearranged weights: tap (di, dj) of the space-to-depth conv gathers the
    # original taps (i, j) = (di*s + p, dj*s + q); unmapped slots stay zero.
    w_taps = jnp.zeros((kd * kd, cs, cout), jnp.float32)
    for i in range(kh):
        for j in range(kw):
            di, dj, p, q = i // s, j // s, i % s, j % s
            c0 = (p * s + q) * cin
            w_taps = w_taps.at[di * kd + dj, c0:c0 + cin, :].set(
                w_oihw[:, :, i, j].T)
    w_taps = w_taps.astype(jnp.bfloat16)
    b2 = b.reshape(1, cout).astype(jnp.float32)

    out = pl.pallas_call(
        partial(_conv_row_kernel, kd=kd, ow=ow),
        out_shape=jax.ShapeDtypeStruct((oh * ow, cout), out_dtype),
        grid=(oh,),
        in_specs=[pl.BlockSpec((hs, ws, cs), lambda r: (0, 0, 0)),
                  pl.BlockSpec((kd * kd, cs, cout), lambda r: (0, 0, 0)),
                  pl.BlockSpec((1, cout), lambda r: (0, 0))],
        out_specs=pl.BlockSpec((ow, cout), lambda r: (r, 0)),
        compiler_params=pltpu.CompilerParams(
            dimension_semantics=("parallel",),
            vmem_limit_bytes=32 * 1024 * 1024),
    )(x_s2d, w_taps, b2)
    return out, oh, ow


# ------------------------------- box scores -----------------------------------

def _box_score_kernel(s_ref, conf_ref):
    # Mirrors _process_feature_extraction: per-box softmax over classes, drop
    # background class 0, max over classes.  Reads the natural
    # (N_BOXES, N_CLASSES) layout (classes on lanes) -- no XLA transpose pass.
    s = s_ref[...]
    m = jnp.max(s, axis=1, keepdims=True)
    e = jnp.exp(s - m)
    p = e / jnp.sum(e, axis=1, keepdims=True)
    cls = lax.broadcasted_iota(jnp.int32, p.shape, 1)
    p = jnp.where(cls == 0, 0.0, p)                   # reference skips class 0
    conf_ref[...] = jnp.max(p, axis=1, keepdims=True)


def box_max_conf(scores):
    n_box, n_cls = scores.shape
    out = pl.pallas_call(
        _box_score_kernel,
        grid=(1,),
        in_specs=[pl.BlockSpec((n_box, n_cls), lambda i: (0, 0))],
        out_specs=pl.BlockSpec((n_box, 1), lambda i: (0, 0)),
        out_shape=jax.ShapeDtypeStruct((n_box, 1), jnp.float32),
        compiler_params=pltpu.CompilerParams(dimension_semantics=("arbitrary",)),
    )(scores)
    return out[:, 0]


# ------------------------- fused Pythia head kernel ---------------------------

def _vqa_head_kernel(keep_ref, q_ref, fc6_ref, res_ref,
                     wq_ref, bq_ref, wad_ref, war_ref,
                     wcd_ref, wcr_ref, wcq_ref, bc_ref,
                     scores_ref, probs_ref, *, mask_idx):
    # 1) top-K gather of detectron fc6 rows as a one-hot matmul in VMEM.  The
    #    whole fc6 block arrives via one pipelined BlockSpec DMA, so there are
    #    no descriptor-bound per-row copies and nothing to wait on.
    topk = keep_ref.shape[0]
    n_box = fc6_ref.shape[0]
    box_ids = lax.broadcasted_iota(jnp.int32, (topk, n_box), 1)
    onehot = (box_ids == keep_ref[...]).astype(jnp.float32)
    det = jnp.dot(onehot, fc6_ref[...],
                  preferred_element_type=jnp.float32)            # (K, Dd) exact

    res = res_ref[...].astype(jnp.float32)                       # (P, Dr)

    # 2) question projection.  TODO(synk): batch questions for M >= 8; the head
    #    is pure latency at M = 1.
    qh = jnp.dot(q_ref[...], wq_ref[...], preferred_element_type=jnp.float32)
    qh = jnp.maximum(qh + bq_ref[...], 0.0)                      # (1, H)

    # 3) attention over detectron features (re-associated: contract HID first,
    #    so no (K, H) intermediate is materialized).
    vd = lax.dot_general(qh, wad_ref[...], (((1,), (1,)), ((), ())),
                         preferred_element_type=jnp.float32)     # (1, Dd)
    ld = lax.dot_general(vd, det, (((1,), (1,)), ((), ())),
                         preferred_element_type=jnp.float32)     # (1, K)
    ld = ld - jnp.max(ld, axis=-1, keepdims=True)
    ed = jnp.exp(ld)
    ad = ed * pl.reciprocal(jnp.sum(ed, axis=-1, keepdims=True), approx=True)
    pooled_d = jnp.dot(ad, det, preferred_element_type=jnp.float32)   # (1, Dd)

    # 4) attention over resnet grid features (same re-association).
    vr = lax.dot_general(qh, war_ref[...], (((1,), (1,)), ((), ())),
                         preferred_element_type=jnp.float32)     # (1, Dr)
    lr = lax.dot_general(vr, res, (((1,), (1,)), ((), ())),
                         preferred_element_type=jnp.float32)     # (1, P)
    lr = lr - jnp.max(lr, axis=-1, keepdims=True)
    er = jnp.exp(lr)
    ar = er * pl.reciprocal(jnp.sum(er, axis=-1, keepdims=True), approx=True)
    pooled_r = jnp.dot(ar, res, preferred_element_type=jnp.float32)   # (1, Dr)

    # 5) classifier over [pooled_d | pooled_r | qh]: weights are pre-split, so
    #    no concat scratch and no store/reload of the feature row.
    scores = (jnp.dot(pooled_d, wcd_ref[...], preferred_element_type=jnp.float32)
              + jnp.dot(pooled_r, wcr_ref[...], preferred_element_type=jnp.float32)
              + jnp.dot(qh, wcq_ref[...], preferred_element_type=jnp.float32)
              + bc_ref[...])
    scores_ref[...] = scores

    # 6) masked_unk_softmax(dim=1, mask_idx) -- exact reciprocals for the final
    #    probabilities (approx is used only in the inner attention softmaxes).
    m = jnp.max(scores, axis=1, keepdims=True)
    e = jnp.exp(scores - m)
    p = e / jnp.sum(e, axis=1, keepdims=True)
    col = lax.broadcasted_iota(jnp.int32, p.shape, 1)
    p = jnp.where(col == mask_idx, 0.0, p)
    probs_ref[...] = p / jnp.sum(p, axis=1, keepdims=True)


def vqa_head(keep, qvec, det_fc6, res_feats, params, *, mask_idx=0):
    topk = int(keep.shape[0])
    n_ans = int(params["bc"].shape[1])
    keep2 = keep.reshape(topk, 1).astype(jnp.int32)

    inputs = (keep2, qvec, det_fc6, res_feats,
              params["wq"], params["bq"], params["wad"], params["war"],
              params["wcd"], params["wcr"], params["wcq"], params["bc"])
    scores, probs = pl.pallas_call(
        partial(_vqa_head_kernel, mask_idx=mask_idx),
        grid=(1,),
        in_specs=[_full_spec(x.shape) for x in inputs],
        out_specs=(_full_spec((1, n_ans)), _full_spec((1, n_ans))),
        out_shape=(jax.ShapeDtypeStruct((1, n_ans), jnp.float32),
                   jax.ShapeDtypeStruct((1, n_ans), jnp.float32)),
        compiler_params=pltpu.CompilerParams(
            dimension_semantics=("arbitrary",),
            vmem_limit_bytes=32 * 1024 * 1024),
    )(*inputs)
    return scores, probs


# ---------------------------------- main ---------------------------------------

if __name__ == "__main__":
    key = jax.random.PRNGKey(0)
    ks = jax.random.split(key, 16)

    # Small, lane-aligned shapes consistent with the module's dataflow.
    SEQ, VOCAB, EMB, HID = 8, 64, 128, 128
    N_BOXES, N_CLASSES, D_DET, TOPK = 128, 32, 128, 16   # analog of 100-box top-K
    N_ANS = 128                                          # analog of answer vocab
    C_IN, IMG, C1, C2 = 3, 32, 32, 128                   # analog of 2048-d resnet feats

    # ---- synthetic `batch` (mimics PythiaVQA.forward input) ----
    question_tokens = jax.random.randint(ks[0], (SEQ,), 0, VOCAB)
    resnet_img = jax.random.normal(ks[1], (C_IN, IMG, IMG), jnp.float32)
    # TODO(synk): the Detectron backbone is an external checkpointed model; its
    # per-box outputs ('scores', 'fc6') are synthesized deterministically here.
    det_scores_raw = jax.random.normal(ks[2], (N_BOXES, N_CLASSES), jnp.float32)
    det_fc6 = jax.random.normal(ks[3], (N_BOXES, D_DET), jnp.float32)

    # ---- deterministic parameters (stand-ins for checkpoints) ----
    sc = 0.1
    embed_tbl = sc * jax.random.normal(ks[4], (VOCAB, EMB), jnp.float32)
    conv1_w = sc * jax.random.normal(ks[5], (C1, C_IN, 3, 3), jnp.float32)
    conv1_b = jnp.zeros((C1,), jnp.float32)
    conv2_w = sc * jax.random.normal(ks[6], (C2, C1, 3, 3), jnp.float32)
    conv2_b = jnp.zeros((C2,), jnp.float32)
    params = dict(
        wq=sc * jax.random.normal(ks[7], (EMB, HID), jnp.float32),
        bq=jnp.zeros((1, HID), jnp.float32),
        wad=sc * jax.random.normal(ks[8], (D_DET, HID), jnp.float32),
        war=sc * jax.random.normal(ks[9], (C2, HID), jnp.float32),
        # classifier weights pre-split per feature stream (no in-kernel concat)
        wcd=sc * jax.random.normal(ks[10], (D_DET, N_ANS), jnp.float32),
        wcr=sc * jax.random.normal(ks[11], (C2, N_ANS), jnp.float32),
        wcq=sc * jax.random.normal(ks[12], (HID, N_ANS), jnp.float32),
        bc=jnp.zeros((1, N_ANS), jnp.float32),
    )

    # ---- get_resnet_features: conv trunk (NHWC) -> permute(0,2,3,1).view(P, C) ----
    # TODO(synk): the real ResNet-152 is an external checkpoint; a 2-layer
    # stride-2 conv/ReLU trunk stands in, with intentional bf16 operands / f32
    # accumulation for the MXU.
    img = resnet_img
    if img.shape[0] == 1:
        img = jnp.broadcast_to(img, (3,) + img.shape[1:])   # img.expand(3, -1, -1)
    x = img.transpose(1, 2, 0)                               # (H, W, C) channels-last
    h1, oh1, ow1 = conv2d_relu(x, conv1_w, conv1_b, stride=2, pad=1)
    res_feats, oh2, ow2 = conv2d_relu(h1.reshape(oh1, ow1, C1), conv2_w, conv2_b,
                                      stride=2, pad=1)
    # res_feats: (oh2*ow2, C2) -- analog of the module's (196, 2048)

    # ---- get_detectron_features / _process_feature_extraction ----
    # TODO(synk): per-class NMS (nms(dets, cls_scores, 0.5)) and bbox/im_scale
    # rescaling have no clean Pallas equivalent (data-dependent sequential
    # suppression); the softmax + background-drop + max_conf + top-K is kept.
    max_conf = box_max_conf(det_scores_raw)                  # (N_BOXES,)
    # TODO(synk): jnp.argsort tie order may differ from torch.sort(descending).
    keep = jnp.argsort(-max_conf)[:TOPK].astype(jnp.int32)

    # ---- text processor: embedding lookup + mean pool (glue) ----
    # TODO(synk): VocabProcessor reads vocabulary files; replaced by a
    # deterministic synthetic embedding table.
    qvec = jnp.mean(jnp.take(embed_tbl, question_tokens, axis=0), axis=0,
                    keepdims=True)

    # ---- pythia_model.forward(sample_list)['scores'] + masked_unk_softmax ----
    # TODO(synk): the real Pythia model (GRU encoder, multi-glimpse attention,
    # large classifier) is an external checkpoint; this fused head keeps the
    # same dataflow (text enc -> attention over both feature streams ->
    # classifier -> masked_unk_softmax) in a single kernel.
    scores, probs = vqa_head(keep, qvec, det_fc6, res_feats, params, mask_idx=0)

    scores, probs = jax.block_until_ready((scores, probs))
    assert scores.shape == (1, N_ANS) and probs.shape == (1, N_ANS)
    assert bool(jnp.all(jnp.isfinite(scores))) and bool(jnp.all(jnp.isfinite(probs)))
    print("KERNEL_OK")
</pallas_src>

<mosaic_0001>
module attributes {stable_mosaic.version = 11 : i64} {
  func.func @_conv_row_kernel(%arg0: i32, %arg1: memref<17x17x12xbf16, #tpu.memory_space<vmem>>, %arg2: memref<4x12x32xbf16, #tpu.memory_space<vmem>>, %arg3: memref<1x32xf32, #tpu.memory_space<vmem>>, %arg4: memref<16x32xbf16, #tpu.memory_space<vmem>>) attributes {dimension_semantics = [#tpu.dimension_semantics<parallel>], iteration_bounds = array<i64: 16>, scalar_prefetch = 0 : i64, scratch_operands = 0 : i64, tpu.core_type = #tpu.core_type<tc>, window_params = [{pipeline_mode = #tpu.pipeline_mode<synchronous>, transform_indices = @transform_0, window_bounds = array<i64: 17, 17, 12>}, {pipeline_mode = #tpu.pipeline_mode<synchronous>, transform_indices = @transform_1, window_bounds = array<i64: 4, 12, 32>}, {pipeline_mode = #tpu.pipeline_mode<synchronous>, transform_indices = @transform_2, window_bounds = array<i64: 1, 32>}, {transform_indices = @transform_3, window_bounds = array<i64: 16, 32>}]} {
    %cst = arith.constant 0.000000e+00 : f32
    %0 = vector.broadcast %cst : f32 to vector<16x32xf32>
    %c0_i32 = arith.constant 0 : i32
    %1 = arith.addi %arg0, %c0_i32 : i32
    %2 = arith.index_cast %1 : i32 to index
    %c0 = arith.constant 0 : index
    %c0_0 = arith.constant 0 : index
    %3 = vector.load %arg1[%2, %c0, %c0_0] : memref<17x17x12xbf16, #tpu.memory_space<vmem>>, vector<1x16x12xbf16>
    %4 = vector.shape_cast %3 : vector<1x16x12xbf16> to vector<16x12xbf16>
    %c0_1 = arith.constant 0 : index
    %c0_2 = arith.constant 0 : index
    %c0_3 = arith.constant 0 : index
    %5 = vector.load %arg2[%c0_1, %c0_2, %c0_3] : memref<4x12x32xbf16, #tpu.memory_space<vmem>>, vector<1x12x32xbf16>
    %6 = vector.shape_cast %5 : vector<1x12x32xbf16> to vector<12x32xbf16>
    %cst_4 = arith.constant dense<0.000000e+00> : vector<16x32xf32>
    %7 = tpu.matmul %4, %6, %cst_4 {dimension_numbers = #tpu.dot_dimension_numbers<[1], [0], [0], [1], [0, 0, 1, 1], [], []>} : vector<16x12xbf16>, vector<12x32xbf16>, vector<16x32xf32> -> vector<16x32xf32>
    %8 = arith.addf %0, %7 : vector<16x32xf32>
    %c0_i32_5 = arith.constant 0 : i32
    %9 = arith.addi %arg0, %c0_i32_5 : i32
    %10 = arith.index_cast %9 : i32 to index
    %c1 = arith.constant 1 : index
    %c0_6 = arith.constant 0 : index
    %11 = vector.load %arg1[%10, %c1, %c0_6] : memref<17x17x12xbf16, #tpu.memory_space<vmem>>, vector<1x16x12xbf16>
    %12 = vector.shape_cast %11 : vector<1x16x12xbf16> to vector<16x12xbf16>
    %c1_7 = arith.constant 1 : index
    %c0_8 = arith.constant 0 : index
    %c0_9 = arith.constant 0 : index
    %13 = vector.load %arg2[%c1_7, %c0_8, %c0_9] : memref<4x12x32xbf16, #tpu.memory_space<vmem>>, vector<1x12x32xbf16>
    %14 = vector.shape_cast %13 : vector<1x12x32xbf16> to vector<12x32xbf16>
    %cst_10 = arith.constant dense<0.000000e+00> : vector<16x32xf32>
    %15 = tpu.matmul %12, %14, %cst_10 {dimension_numbers = #tpu.dot_dimension_numbers<[1], [0], [0], [1], [0, 0, 1, 1], [], []>} : vector<16x12xbf16>, vector<12x32xbf16>, vector<16x32xf32> -> vector<16x32xf32>
    %16 = arith.addf %8, %15 : vector<16x32xf32>
    %c1_i32 = arith.constant 1 : i32
    %17 = arith.addi %arg0, %c1_i32 : i32
    %18 = arith.index_cast %17 : i32 to index
    %c0_11 = arith.constant 0 : index
    %c0_12 = arith.constant 0 : index
    %19 = vector.load %arg1[%18, %c0_11, %c0_12] : memref<17x17x12xbf16, #tpu.memory_space<vmem>>, vector<1x16x12xbf16>
    %20 = vector.shape_cast %19 : vector<1x16x12xbf16> to vector<16x12xbf16>
    %c2 = arith.constant 2 : index
    %c0_13 = arith.constant 0 : index
    %c0_14 = arith.constant 0 : index
    %21 = vector.load %arg2[%c2, %c0_13, %c0_14] : memref<4x12x32xbf16, #tpu.memory_space<vmem>>, vector<1x12x32xbf16>
    %22 = vector.shape_cast %21 : vector<1x12x32xbf16> to vector<12x32xbf16>
    %cst_15 = arith.constant dense<0.000000e+00> : vector<16x32xf32>
    %23 = tpu.matmul %20, %22, %cst_15 {dimension_numbers = #tpu.dot_dimension_numbers<[1], [0], [0], [1], [0, 0, 1, 1], [], []>} : vector<16x12xbf16>, vector<12x32xbf16>, vector<16x32xf32> -> vector<16x32xf32>
    %24 = arith.addf %16, %23 : vector<16x32xf32>
    %c1_i32_16 = arith.constant 1 : i32
    %25 = arith.addi %arg0, %c1_i32_16 : i32
    %26 = arith.index_cast %25 : i32 to index
    %c1_17 = arith.constant 1 : index
    %c0_18 = arith.constant 0 : index
    %27 = vector.load %arg1[%26, %c1_17, %c0_18] : memref<17x17x12xbf16, #tpu.memory_space<vmem>>, vector<1x16x12xbf16>
    %28 = vector.shape_cast %27 : vector<1x16x12xbf16> to vector<16x12xbf16>
    %c3 = arith.constant 3 : index
    %c0_19 = arith.constant 0 : index
    %c0_20 = arith.constant 0 : index
    %29 = vector.load %arg2[%c3, %c0_19, %c0_20] : memref<4x12x32xbf16, #tpu.memory_space<vmem>>, vector<1x12x32xbf16>
    %30 = vector.shape_cast %29 : vector<1x12x32xbf16> to vector<12x32xbf16>
    %cst_21 = arith.constant dense<0.000000e+00> : vector<16x32xf32>
    %31 = tpu.matmul %28, %30, %cst_21 {dimension_numbers = #tpu.dot_dimension_numbers<[1], [0], [0], [1], [0, 0, 1, 1], [], []>} : vector<16x12xbf16>, vector<12x32xbf16>, vector<16x32xf32> -> vector<16x32xf32>
    %32 = arith.addf %24, %31 : vector<16x32xf32>
    %c0_22 = arith.constant 0 : index
    %c0_23 = arith.constant 0 : index
    %33 = vector.load %arg3[%c0_22, %c0_23] : memref<1x32xf32, #tpu.memory_space<vmem>>, vector<1x32xf32>
    %34 = vector.broadcast %33 : vector<1x32xf32> to vector<16x32xf32>
    %35 = arith.addf %32, %34 : vector<16x32xf32>
    %cst_24 = arith.constant 0.000000e+00 : f32
    %36 = vector.broadcast %cst_24 : f32 to vector<16x32xf32>
    %37 = arith.maximumf %35, %36 : vector<16x32xf32>
    %38 = arith.truncf %37 : vector<16x32xf32> to vector<16x32xbf16>
    %c0_25 = arith.constant 0 : index
    %c0_26 = arith.constant 0 : index
    %39 = vector.load %arg4[%c0_25, %c0_26] : memref<16x32xbf16, #tpu.memory_space<vmem>>, vector<16x32xbf16>
    tpu.vector_store %arg4[%c0_25, %c0_26], %38 {strides = array<i32>} : memref<16x32xbf16, #tpu.memory_space<vmem>>, vector<16x32xbf16>,
    return
  }
  func.func @transform_0(%arg0: i32) -> (i32, i32, i32) {
    %c0_i32 = arith.constant 0 : i32
    %c0_i32_0 = arith.constant 0 : i32
    %c0_i32_1 = arith.constant 0 : i32
    %c0_i32_2 = arith.constant 0 : i32
    return %c0_i32, %c0_i32_0, %c0_i32_1 : i32, i32, i32
  }
  func.func @transform_1(%arg0: i32) -> (i32, i32, i32) {
    %c0_i32 = arith.constant 0 : i32
    %c0_i32_0 = arith.constant 0 : i32
    %c0_i32_1 = arith.constant 0 : i32
    %c0_i32_2 = arith.constant 0 : i32
    return %c0_i32, %c0_i32_0, %c0_i32_1 : i32, i32, i32
  }
  func.func @transform_2(%arg0: i32) -> (i32, i32) {
    %c0_i32 = arith.constant 0 : i32
    %c0_i32_0 = arith.constant 0 : i32
    %c0_i32_1 = arith.constant 0 : i32
    return %c0_i32, %c0_i32_0 : i32, i32
  }
  func.func @transform_3(%arg0: i32) -> (i32, i32) {
    %c0_i32 = arith.constant 0 : i32
    %c0_i32_0 = arith.constant 0 : i32
    return %arg0, %c0_i32 : i32, i32
  }
}

</mosaic_0001>

<llo_original>
// kernel: tpu_custom_call.1
$region0: #{tpu_custom_call.1}
  #allocation0 [shape = 'u32[]', space=smem, size = 0x4, offset = 0x4, fixed_abs, tag = 'smem constant byte address 0x4 - core index']
  #allocation1 [shape = 'u32[144,128]{1,0:T(1,128)}', space=vmem, size = 0x12000, scoped, tag = 'internal scratch']
  %s0 = inlined_call_operand.vmem [shape: bf16[17,17,12], index: 0, kind: input, shape index: {}]
  %s1 = inlined_call_operand.vmem [shape: bf16[4,12,32], index: 1, kind: input, shape index: {}]
  %s2 = inlined_call_operand.vmem [shape: f32[1,32], index: 2, kind: input, shape index: {}]
  %s3 = inlined_call_operand.vmem [shape: bf16[256,32], index: 3, kind: output, shape index: {}]
  %s4 = sld [smem:[#allocation0]]
  $region45: #{tpu_custom_call.1} parent=0
    _
  %s6 = ssub.s32 1, %s4
  %s7 = scalar_select 0, %s6, %s4
  loop: start=0, step=1, limit=18
  $region2: #{tpu_custom_call.1} parent=0 // loop_pre_header
    _
  $region3: #{tpu_custom_call.1} parent=0 // loop_header
    %s9 = sphi 0, %s13
    %p10 = scmp.ge.s32.totalorder %s9, 18
    %s17 = sphi 0, %s17
    %s19 = sphi 0, %s17
    %s20 = sphi 0, %s19
    %s34 = sphi 0, %s20
    %s38 = sphi 0, %s38
    %s40 = sphi 0, %s38
    %s41 = sphi 0, %s40
    %s55 = sphi 0, %s41
    %s59 = sphi 0, %s59
    %s61 = sphi 0, %s59
    %s62 = sphi 0, %s61
    %s76 = sphi 0, %s62
    %s82 = sphi 0, %s84
    %s85 = sphi 0, %s82
    %s86 = sphi 0, %s85
    %s102 = sphi 0, %s86
  $region4: #{tpu_custom_call.1} parent=0 // loop_header_branch
    %12 = sbr.rel (%p10) target = $region8
  $region5: #{tpu_custom_call.1} parent=0 // loop_body
    %s14 = ssub.s32 %s9, 1
    %s15 = ssub.s32 %s9, 2
    %s16 = sadd.s32 %s9, 1
    %s18 = sadd.s32 %s17, 1
    %p21 = scmp.eq.s32.totalorder %s9, 15
    %p22 = scmp.ne.s32.totalorder %s17, %s19
    %p23 = scmp.eq.s32.totalorder %s9, 0
    %p24 = por %p22, %p23
    %p25 = scmp.ne.s32.totalorder %s17, %s19
    %p26 = scmp.eq.s32.totalorder %s14, 15
    %p27 = por %p25, %p26
    %p28 = scmp.ne.s32.totalorder %s19, %s20
    %p29 = scmp.eq.s32.totalorder %s14, 0
    %p30 = por %p28, %p29
    %p31 = scmp.ne.s32.totalorder %s19, %s20
    %p32 = scmp.eq.s32.totalorder %s15, 15
    %p33 = por %p31, %p32
    %p35 = scmp.ne.s32.totalorder %s20, %s34
    %p36 = scmp.eq.s32.totalorder %s15, 0
    %p37 = por %p35, %p36
    %s39 = sadd.s32 %s38, 1
    %p42 = scmp.eq.s32.totalorder %s9, 15
    %p43 = scmp.ne.s32.totalorder %s38, %s40
    %p44 = scmp.eq.s32.totalorder %s9, 0
    %p45 = por %p43, %p44
    %p46 = scmp.ne.s32.totalorder %s38, %s40
    %p47 = scmp.eq.s32.totalorder %s14, 15
    %p48 = por %p46, %p47
    %p49 = scmp.ne.s32.totalorder %s40, %s41
    %p50 = scmp.eq.s32.totalorder %s14, 0
    %p51 = por %p49, %p50
    %p52 = scmp.ne.s32.totalorder %s40, %s41
    %p53 = scmp.eq.s32.totalorder %s15, 15
    %p54 = por %p52, %p53
    %p56 = scmp.ne.s32.totalorder %s41, %s55
    %p57 = scmp.eq.s32.totalorder %s15, 0
    %p58 = por %p56, %p57
    %s60 = sadd.s32 %s59, 1
    %p63 = scmp.eq.s32.totalorder %s9, 15
    %p64 = scmp.ne.s32.totalorder %s59, %s61
    %p65 = scmp.eq.s32.totalorder %s9, 0
    %p66 = por %p64, %p65
    %p67 = scmp.ne.s32.totalorder %s59, %s61
    %p68 = scmp.eq.s32.totalorder %s14, 15
    %p69 = por %p67, %p68
    %p70 = scmp.ne.s32.totalorder %s61, %s62
    %p71 = scmp.eq.s32.totalorder %s14, 0
    %p72 = por %p70, %p71
    %p73 = scmp.ne.s32.totalorder %s61, %s62
    %p74 = scmp.eq.s32.totalorder %s15, 15
    %p75 = por %p73, %p74
    %p77 = scmp.ne.s32.totalorder %s62, %s76
    %p78 = scmp.eq.s32.totalorder %s15, 0
    %p79 = por %p77, %p78
    %s80 = ssub.s32 %s9, %s16
    %p81 = scmp.eq.s32.totalorder %s80, 0
    %s83 = sadd.s32 %s82, 1
    %s84 = scalar_select %p81, %s82, %s83
    %p87 = pneg %p81
    %p88 = scmp.eq.s32.totalorder %s9, 15
    %p89 = por %p87, %p88
    %p90 = scmp.ne.s32.totalorder %s82, %s85
    %p91 = scmp.eq.s32.totalorder %s9, 0
    %p92 = por %p90, %p91
    %p93 = scmp.ne.s32.totalorder %s82, %s85
    %p94 = scmp.eq.s32.totalorder %s14, 15
    %p95 = por %p93, %p94
    %p96 = scmp.ne.s32.totalorder %s85, %s86
    %p97 = scmp.eq.s32.totalorder %s14, 0
    %p98 = por %p96, %p97
    %p99 = scmp.ne.s32.totalorder %s85, %s86
    %p100 = scmp.eq.s32.totalorder %s15, 15
    %p101 = por %p99, %p100
    %p103 = scmp.ne.s32.totalorder %s86, %s102
    %p104 = scmp.eq.s32.totalorder %s15, 0
    %p105 = por %p103, %p104
    %p106 = scmp.le.s32.totalorder 1, %s9
    %p107 = scmp.lt.s32.totalorder %s9, 17
    %p108 = pnand %p106, %p107
    %p109 = pneg %p108
    // Predicated region
    $region9: #{tpu_custom_call.1} parent=5 // pred_check
      _
    $region10: #{tpu_custom_call.1} parent=5 // pred_check_branch
      %111 = sbr.rel (%p108) target = $region12
    $region11: #{tpu_custom_call.1} parent=5 // pred_region
      %s112 = ssub.s32 %s9, 1
      // Predicated region
      $region13: #{tpu_custom_call.1} parent=11 // pred_check
        %p113 = pneg %p30
      $region14: #{tpu_custom_call.1} parent=11 // pred_check_branch
        %115 = sbr.rel (%p113) target = $region16
      $region15: #{tpu_custom_call.1} parent=11 // pred_region
        _
      $region16: #{tpu_custom_call.1} parent=11 // pred_fallthru
        _
      // Predicated region
      $region17: #{tpu_custom_call.1} parent=11 // pred_check
        %p116 = pneg %p51
      $region18: #{tpu_custom_call.1} parent=11 // pred_check_branch
        %118 = sbr.rel (%p116) target = $region20
      $region19: #{tpu_custom_call.1} parent=11 // pred_region
        _
      $region20: #{tpu_custom_call.1} parent=11 // pred_fallthru
        _
      // Predicated region
      $region21: #{tpu_custom_call.1} parent=11 // pred_check
        %p119 = pneg %p72
      $region22: #{tpu_custom_call.1} parent=11 // pred_check_branch
        %121 = sbr.rel (%p119) target = $region24
      $region23: #{tpu_custom_call.1} parent=11 // pred_region
        _
      $region24: #{tpu_custom_call.1} parent=11 // pred_fallthru
        _
    $region12: #{tpu_custom_call.1} parent=5 // pred_fallthru
      _
    %p122 = scmp.lt.s32.totalorder %s9, 16
    // Predicated region
    $region25: #{tpu_custom_call.1} parent=5 // pred_check
      %p123 = pneg %p122
    $region26: #{tpu_custom_call.1} parent=5 // pred_check_branch
      %125 = sbr.rel (%p123) target = $region28
    $region27: #{tpu_custom_call.1} parent=5 // pred_region
      _
    $region28: #{tpu_custom_call.1} parent=5 // pred_fallthru
      _
    %p126 = scmp.le.s32.totalorder 1, %s9
    %p127 = scmp.lt.s32.totalorder %s9, 17
    %p128 = pnand %p126, %p127
    %p129 = pneg %p128
    // Predicated region
    $region29: #{tpu_custom_call.1} parent=5 // pred_check
      _
    $region30: #{tpu_custom_call.1} parent=5 // pred_check_branch
      %131 = sbr.rel (%p128) target = $region32
    $region31: #{tpu_custom_call.1} parent=5 // pred_region
      %s132 = ssub.s32 %s9, 1
      %p133 = pneg %p30
      %p134 = pneg %p27
      %p135 = pneg %p51
      %p136 = pneg %p48
      %p137 = pneg %p72
      %p138 = pneg %p69
      %p139 = pneg %p98
      %p140 = pneg %p95
      %s141 = smul.u32 2, %s14
      %p142 = scmp.lt.s32.totalorder %s141, 31
      %s143 = scalar_select %p142, %s141, 31
      %s144 = smul.addr %s143, 4
      %s145 = scalar_lea.vmem %s3, %s144
      %s146 = smul.u32 2, %s14
      %p147 = scmp.lt.s32.totalorder %s146, 31
      %s148 = scalar_select %p147, %s146, 31
      %s149 = smul.addr %s148, 4
      %s150 = scalar_lea.vmem %s3, %s149
      %s151 = smul.u32 2, %s14
      %s153 = smul.u32 %s14, 3
      %s154 = smul.addr %s153, 4
      %s155 = scalar_lea.vmem %s0, %s154
      %v156 = vld [vmem:[%s155] sm:$0xf]
      %v157 = vld [vmem:[%s155 + $0x4] sm:$0xf]
      %v158 = vld [vmem:[%s1] sm:$0xf]
      %v159 = vld [vmem:[%s1 + $0x4] sm:$0x3]
      %v160 = vld [vmem:[%s155 + $0x8] sm:$0x1]
      %s161 = scalar_lea.vmem %s1, 8
      %v162 = vld [vmem:[%s161] sm:$0xf]
      %v163 = vld [vmem:[%s161 + $0x4] sm:$0x3]
      %v167 = vunpack.c.l.b16 %v156
      %v168 = vunpack.c.l.b16 %v157
      %v169 = vunpack.c.l.b16 %v160
      %v170 = vpack.c.b16 %v168, %v167
      %v171 = vpack.c.b16 %v169, %v169
      %vm172 = vsmask.f32 7424
      %v174 = vshrl.u32 %v170, 16
      %v176 = vshll.u32 %v170, 16
      %v178 = vrot.slane %v176, 1
      %v179 = vor.u32 %v174, %v178
      %v181 = vshll.u32 %v171, 16
      %v183 = vrot.slane %v181, 1
      %v184 = vsel %vm172, %v179, %v183
      %v187 = vunpack.c.l.b16 %v162
      %v188 = vunpack.c.l.b16 %v163
      %v189 = vpack.c.b16 %v188, %v187
      %vm190 = vcmask 97280
      %v192 = vsel %vm190, %v184, 0
      %vm194 = vcmask 1045504
      %v196 = vsel %vm194, %v189, 0
      %198 = vmatprep.subr.bf16.mxu0 0
      %199 = vmatpush1.bf16.msra.mxu0 0
      %200 = vmatprep.subr.bf16.mxu0 0
      %201 = vmatpush1.bf16.msra.mxu0 0
      %202 = vmatprep.subr.bf16.mxu0 0
      %203 = vmatpush1.bf16.msra.mxu0 0
      %204 = vmatprep.subr.bf16.mxu0 0
      %205 = vmatpush1.bf16.msra.mxu0 0
      %206 = vmatprep.subr.bf16.mxu0 0
      %207 = vmatpush1.bf16.msra.mxu0 0
      %208 = vmatprep.subr.bf16.mxu0 0
      %209 = vmatpush1.bf16.msra.mxu0 0
      %210 = vmatprep.subr.bf16.mxu0 0
      %211 = vmatpush1.bf16.msra.mxu0 0
      %212 = vmatprep.subr.bf16.mxu0 0
      %213 = vmatpush1.bf16.msra.mxu0 %v196
      %214 = vmatprep.subr.bf16.mxu0 0
      %215 = vmatpush2.bf16.msra.mxu0 0
      %216 = vmatprep.subr.bf16.mxu0 0
      %217 = vmatpush2.bf16.msra.mxu0 0
      %218 = vmatprep.subr.bf16.mxu0 0
      %219 = vmatpush2.bf16.msra.mxu0 0
      %220 = vmatprep.subr.bf16.mxu0 0
      %221 = vmatpush2.bf16.msra.mxu0 0
      %222 = vmatprep.subr.bf16.mxu0 0
      %223 = vmatpush2.bf16.msra.mxu0 0
      %224 = vmatprep.subr.bf16.mxu0 0
      %225 = vmatpush2.bf16.msra.mxu0 0
      %226 = vmatprep.subr.bf16.mxu0 0
      %227 = vmatpush2.bf16.msra.mxu0 0
      %228 = vmatprep.subr.bf16.mxu0 0
      %229 = vmatpush2.bf16.msra.mxu0 0
      %230 = vmatprep.mubr.bf16.mxu0 0
      %231 = vmatmul.mubr.bf16.gmra.mxu0 %v192
      %v232 = vpop.f32.mrf.mxu0
      %v233 = vadd.f32 0.0, %v232
      %v234 = vpop.f32.mrf.mxu0
      %v235 = vpop.f32.mrf.mxu0
      %v236 = vadd.f32 0.0, %v235
      %v237 = vpop.f32.mrf.mxu0
      %238 = vdwg.mxu0
      %v241 = vunpack.c.l.b16 %v158
      %v242 = vunpack.c.l.b16 %v159
      %v243 = vpack.c.b16 %v242, %v241
      %v244 = vsel %vm190, %v170, 0
      %v247 = vsel %vm194, %v243, 0
      %249 = vmatprep.subr.bf16.mxu0 0
      %250 = vmatpush1.bf16.msra.mxu0 0
      %251 = vmatprep.subr.bf16.mxu0 0
      %252 = vmatpush1.bf16.msra.mxu0 0
      %253 = vmatprep.subr.bf16.mxu0 0
      %254 = vmatpush1.bf16.msra.mxu0 0
      %255 = vmatprep.subr.bf16.mxu0 0
      %256 = vmatpush1.bf16.msra.mxu0 0
      %257 = vmatprep.subr.bf16.mxu0 0
      %258 = vmatpush1.bf16.msra.mxu0 0
      %259 = vmatprep.subr.bf16.mxu0 0
      %260 = vmatpush1.bf16.msra.mxu0 0
      %261 = vmatprep.subr.bf16.mxu0 0
      %262 = vmatpush1.bf16.msra.mxu0 0
      %263 = vmatprep.subr.bf16.mxu0 0
      %264 = vmatpush1.bf16.msra.mxu0 %v247
      %265 = vmatprep.subr.bf16.mxu0 0
      %266 = vmatpush2.bf16.msra.mxu0 0
      %267 = vmatprep.subr.bf16.mxu0 0
      %268 = vmatpush2.bf16.msra.mxu0 0
      %269 = vmatprep.subr.bf16.mxu0 0
      %270 = vmatpush2.bf16.msra.mxu0 0
      %271 = vmatprep.subr.bf16.mxu0 0
      %272 = vmatpush2.bf16.msra.mxu0 0
      %273 = vmatprep.subr.bf16.mxu0 0
      %274 = vmatpush2.bf16.msra.mxu0 0
      %275 = vmatprep.subr.bf16.mxu0 0
      %276 = vmatpush2.bf16.msra.mxu0 0
      %277 = vmatprep.subr.bf16.mxu0 0
      %278 = vmatpush2.bf16.msra.mxu0 0
      %279 = vmatprep.subr.bf16.mxu0 0
      %280 = vmatpush2.bf16.msra.mxu0 0
      %281 = vmatprep.mubr.bf16.mxu0 0
      %282 = vmatmul.mubr.bf16.gmra.mxu0 %v244
      %v283 = vpop.f32.mrf.mxu0
      %v284 = vadd.f32 %v233, %v283
      %v285 = vpop.f32.mrf.mxu0
      %v286 = vpop.f32.mrf.mxu0
      %v287 = vadd.f32 %v236, %v286
      %v288 = vpop.f32.mrf.mxu0
      %289 = vdwg.mxu0
      %s290 = sadd.s32 %s14, 1
      %s291 = smul.u32 %s290, 3
      %s292 = smul.addr %s291, 4
      %s293 = scalar_lea.vmem %s0, %s292
      %v294 = vld [vmem:[%s293] sm:$0xf]
      %v295 = vld [vmem:[%s293 + $0x4] sm:$0xf]
      %s296 = scalar_lea.vmem %s1, 16
      %v297 = vld [vmem:[%s296] sm:$0xf]
      %v298 = vld [vmem:[%s296 + $0x4] sm:$0x3]
      %v301 = vunpack.c.l.b16 %v294
      %v302 = vunpack.c.l.b16 %v295
      %v303 = vpack.c.b16 %v302, %v301
      %v306 = vunpack.c.l.b16 %v297
      %v307 = vunpack.c.l.b16 %v298
      %v308 = vpack.c.b16 %v307, %v306
      %v310 = vsel %vm190, %v303, 0
      %v313 = vsel %vm194, %v308, 0
      %315 = vmatprep.subr.bf16.mxu0 0
      %316 = vmatpush1.bf16.msra.mxu0 0
      %317 = vmatprep.subr.bf16.mxu0 0
      %318 = vmatpush1.bf16.msra.mxu0 0
      %319 = vmatprep.subr.bf16.mxu0 0
      %320 = vmatpush1.bf16.msra.mxu0 0
      %321 = vmatprep.subr.bf16.mxu0 0
      %322 = vmatpush1.bf16.msra.mxu0 0
      %323 = vmatprep.subr.bf16.mxu0 0
      %324 = vmatpush1.bf16.msra.mxu0 0
      %325 = vmatprep.subr.bf16.mxu0 0
      %326 = vmatpush1.bf16.msra.mxu0 0
      %327 = vmatprep.subr.bf16.mxu0 0
      %328 = vmatpush1.bf16.msra.mxu0 0
      %329 = vmatprep.subr.bf16.mxu0 0
      %330 = vmatpush1.bf16.msra.mxu0 %v313
      %331 = vmatprep.subr.bf16.mxu0 0
      %332 = vmatpush2.bf16.msra.mxu0 0
      %333 = vmatprep.subr.bf16.mxu0 0
      %334 = vmatpush2.bf16.msra.mxu0 0
      %335 = vmatprep.subr.bf16.mxu0 0
      %336 = vmatpush2.bf16.msra.mxu0 0
      %337 = vmatprep.subr.bf16.mxu0 0
      %338 = vmatpush2.bf16.msra.mxu0 0
      %339 = vmatprep.subr.bf16.mxu0 0
      %340 = vmatpush2.bf16.msra.mxu0 0
      %341 = vmatprep.subr.bf16.mxu0 0
      %342 = vmatpush2.bf16.msra.mxu0 0
      %343 = vmatprep.subr.bf16.mxu0 0
      %344 = vmatpush2.bf16.msra.mxu0 0
      %345 = vmatprep.subr.bf16.mxu0 0
      %346 = vmatpush2.bf16.msra.mxu0 0
      %347 = vmatprep.mubr.bf16.mxu0 0
      %348 = vmatmul.mubr.bf16.gmra.mxu0 %v310
      %v349 = vpop.f32.mrf.mxu0
      %v350 = vadd.f32 0.0, %v349
      %v351 = vpop.f32.mrf.mxu0
      %v352 = vpop.f32.mrf.mxu0
      %v353 = vadd.f32 0.0, %v352
      %v354 = vpop.f32.mrf.mxu0
      %355 = vdwg.mxu0
      %v356 = vadd.f32 %v284, %v350
      %v357 = vadd.f32 %v287, %v353
      %v358 = vld [vmem:[%s293] sm:$0xf]
      %v359 = vld [vmem:[%s293 + $0x4] sm:$0xf]
      %v360 = vld [vmem:[%s293 + $0x8] sm:$0x1]
      %s361 = scalar_lea.vmem %s1, 24
      %v362 = vld [vmem:[%s361] sm:$0xf]
      %v363 = vld [vmem:[%s361 + $0x4] sm:$0x3]
      %v367 = vunpack.c.l.b16 %v358
      %v368 = vunpack.c.l.b16 %v359
      %v369 = vunpack.c.l.b16 %v360
      %v370 = vpack.c.b16 %v368, %v367
      %v371 = vpack.c.b16 %v369, %v369
      %v373 = vshrl.u32 %v370, 16
      %v375 = vshll.u32 %v370, 16
      %v377 = vrot.slane %v375, 1
      %v378 = vor.u32 %v373, %v377
      %v380 = vshll.u32 %v371, 16
      %v382 = vrot.slane %v380, 1
      %v383 = vsel %vm172, %v378, %v382
      %v386 = vunpack.c.l.b16 %v362
      %v387 = vunpack.c.l.b16 %v363
      %v388 = vpack.c.b16 %v387, %v386
      %v390 = vsel %vm190, %v383, 0
      %v393 = vsel %vm194, %v388, 0
      %395 = vmatprep.subr.bf16.mxu0 0
      %396 = vmatpush1.bf16.msra.mxu0 0
      %397 = vmatprep.subr.bf16.mxu0 0
      %398 = vmatpush1.bf16.msra.mxu0 0
      %399 = vmatprep.subr.bf16.mxu0 0
      %400 = vmatpush1.bf16.msra.mxu0 0
      %401 = vmatprep.subr.bf16.mxu0 0
      %402 = vmatpush1.bf16.msra.mxu0 0
      %403 = vmatprep.subr.bf16.mxu0 0
      %404 = vmatpush1.bf16.msra.mxu0 0
      %405 = vmatprep.subr.bf16.mxu0 0
      %406 = vmatpush1.bf16.msra.mxu0 0
      %407 = vmatprep.subr.bf16.mxu0 0
      %408 = vmatpush1.bf16.msra.mxu0 0
      %409 = vmatprep.subr.bf16.mxu0 0
      %410 = vmatpush1.bf16.msra.mxu0 %v393
      %411 = vmatprep.subr.bf16.mxu0 0
      %412 = vmatpush2.bf16.msra.mxu0 0
      %413 = vmatprep.subr.bf16.mxu0 0
      %414 = vmatpush2.bf16.msra.mxu0 0
      %415 = vmatprep.subr.bf16.mxu0 0
      %416 = vmatpush2.bf16.msra.mxu0 0
      %417 = vmatprep.subr.bf16.mxu0 0
      %418 = vmatpush2.bf16.msra.mxu0 0
      %419 = vmatprep.subr.bf16.mxu0 0
      %420 = vmatpush2.bf16.msra.mxu0 0
      %421 = vmatprep.subr.bf16.mxu0 0
      %422 = vmatpush2.bf16.msra.mxu0 0
      %423 = vmatprep.subr.bf16.mxu0 0
      %424 = vmatpush2.bf16.msra.mxu0 0
      %425 = vmatprep.subr.bf16.mxu0 0
      %426 = vmatpush2.bf16.msra.mxu0 0
      %427 = vmatprep.mubr.bf16.mxu0 0
      %428 = vmatmul.mubr.bf16.gmra.mxu0 %v390
      %v429 = vpop.f32.mrf.mxu0
      %v430 = vadd.f32 0.0, %v429
      %v431 = vpop.f32.mrf.mxu0
      %v432 = vpop.f32.mrf.mxu0
      %v433 = vadd.f32 0.0, %v432
      %v434 = vpop.f32.mrf.mxu0
      %435 = vdwg.mxu0
      %v436 = vadd.f32 %v356, %v430
      %v437 = vadd.f32 %v357, %v433
      %v438 = vld [vmem:[%s2] sm:$0x1]
      %v440 = vlaneseq
      %v441 = vshrl.u32 %v440, 7
      %v442 = vsub.s32 0, %v441
      %v443 = vrot.slane %v438, %v442
      %v445 = vadd.f32 %v436, %v443
      %v446 = vadd.f32 %v437, %v443
      %v447 = vmax.f32 %v445, 0.0
      %v448 = vmax.f32 %v446, 0.0
      %v449 = vpack.c.bf16 %v448, %v447
      %v451 = vunpack.c.l.b16 %v449
      %v452 = vunpack.c.h.b16 %v449
      %v453 = vpack.c.b16 %v451, %v451
      %v454 = vpack.c.b16 %v452, %v452
      %vm457 = vcmask 257024
      %458 = vst.msk [vmem:[%s150] sm:$0xf] %vm457, %v453
      %459 = vst.msk [vmem:[%s150 + $0x4] sm:$0xf] %vm457, %v454
      %s460 = smul.u32 2, %s14
      %p461 = scmp.lt.s32.totalorder %s460, 31
      %s462 = scalar_select %p461, %s460, 31
      %s463 = smul.addr %s462, 4
      %s464 = scalar_lea.vmem %s3, %s463
      // Predicated region
      $region33: #{tpu_custom_call.1} parent=31 // pred_check
        %p465 = pneg %p95
      $region34: #{tpu_custom_call.1} parent=31 // pred_check_branch
        %467 = sbr.rel (%p465) target = $region36
      $region35: #{tpu_custom_call.1} parent=31 // pred_region
        %s468 = smul.u32 2, %s14
      $region36: #{tpu_custom_call.1} parent=31 // pred_fallthru
        _
    $region32: #{tpu_custom_call.1} parent=5 // pred_fallthru
      _
    %p469 = scmp.le.s32.totalorder 2, %s9
    // Predicated region
    $region37: #{tpu_custom_call.1} parent=5 // pred_check
      %p470 = pneg %p469
    $region38: #{tpu_custom_call.1} parent=5 // pred_check_branch
      %472 = sbr.rel (%p470) target = $region40
    $region39: #{tpu_custom_call.1} parent=5 // pred_region
      %s473 = ssub.s32 %s9, 2
      // Predicated region
      $region41: #{tpu_custom_call.1} parent=39 // pred_check
        %p474 = pneg %p101
      $region42: #{tpu_custom_call.1} parent=39 // pred_check_branch
        %476 = sbr.rel (%p474) target = $region44
      $region43: #{tpu_custom_call.1} parent=39 // pred_region
        %s477 = smul.u32 2, %s15
        %p478 = scmp.lt.s32.totalorder %s477, 31
        %s479 = scalar_select %p478, %s477, 31
        %s480 = smul.addr %s479, 4
        %s481 = scalar_lea.vmem %s3, %s480
      $region44: #{tpu_custom_call.1} parent=39 // pred_fallthru
        _
    $region40: #{tpu_custom_call.1} parent=5 // pred_fallthru
      _
  $region6: #{tpu_custom_call.1} parent=0 // loop_footer
    %s13 = sadd.s32 1, %s9
  $region7: #{tpu_custom_call.1} parent=0 // loop_footer_branch
    %8 = sbr.rel target = $region3
  $region8: #{tpu_custom_call.1} parent=0 // loop_exit
    _

</llo_original>
